<compile_context>
chip_gen: v5e
topology: v5e:2x2
jax: 0.10.0
libtpu: 0.0.40
codegen_flags: <defaults>
</compile_context>

<pallas_src>
import functools
import math

import jax
import jax.numpy as jnp
from jax import lax
from jax.experimental import pallas as pl
from jax.experimental.pallas import tpu as pltpu

_LANE_PAD = 128          # lane-dense padded width for the final projection
_PER_BUF_BYTES = 16 << 20  # x-tile budget per pipeline buffer (double-buffered)
_VMEM_LIMIT = 48 << 20     # scoped VMEM limit: under v7x 64 MiB physical,
                           # well above the 16/32 MiB defaults on v5e/v6e


def _mlp_kernel(x_ref, w1_ref, b1_ref, w2_ref, b2_ref, w3_ref, b3_ref,
                o_ref, acc_ref, *, inv_s, seq_len, ts, need_s_mask):
    s = pl.program_id(1)

    @pl.when(s == 0)
    def _():
        acc_ref[...] = jnp.zeros_like(acc_ref)

    # x_ref: (TB, TS, E) in the input's native dtype (f32).
    x = x_ref[...]
    if need_s_mask:
        # Ragged last S tile: zero out-of-range rows before accumulating.
        idx = lax.broadcasted_iota(jnp.int32, x.shape, 1) + s * ts
        x = jnp.where(idx < seq_len, x, jnp.zeros_like(x))
    # transpose + AdaptiveAvgPool1d(1) + Flatten == mean over the sequence axis.
    # Accumulate the sum in f32; the 1/S scale is folded in after the first dot.
    acc_ref[...] += jnp.sum(x, axis=1, dtype=jnp.float32)

    @pl.when(s == pl.num_programs(1) - 1)
    def _():
        pooled = acc_ref[...]                                        # (TB, E) f32
        h1 = jnp.dot(pooled.astype(jnp.bfloat16), w1_ref[...],
                     preferred_element_type=jnp.float32) * inv_s + b1_ref[...]
        h1 = jnp.maximum(h1, 0.0)                                    # (TB, H)
        h2 = jnp.dot(h1.astype(jnp.bfloat16), w2_ref[...],
                     preferred_element_type=jnp.float32) + b2_ref[...]
        h2 = jnp.maximum(h2, 0.0)                                    # (TB, H//4)
        out = jnp.dot(h2.astype(jnp.bfloat16), w3_ref[...],
                      preferred_element_type=jnp.float32) + b3_ref[...]
        o_ref[...] = out.astype(o_ref.dtype)                         # (TB, 128)


def _choose_tiles(B, S, E, itemsize):
    """Pick (TB, TS) from an explicit per-buffer byte budget.

    Keeps each double-buffered x tile <= _PER_BUF_BYTES so the kernel stays
    under _VMEM_LIMIT on every generation (incl. v7x's 64 MiB physical VMEM),
    while using tiles large enough to sit near the HBM roofline.
    """
    row_bytes = S * E * itemsize
    tb = _PER_BUF_BYTES // max(row_bytes, 1)
    if tb >= B:
        tb, ts = B, S
        # v7x has 2 TensorCores: give the 'parallel' batch axis >= 2 steps when
        # there is enough work to split without tiny sublane blocks.
        if B >= 16:
            tb = max(8, (pl.cdiv(B, 2) // 8) * 8)
    elif tb >= 8:
        tb, ts = (tb // 8) * 8, S
    else:
        # Even 8 batch rows of full-S exceed the budget: tile the sequence too.
        tb = min(8, B)
        ts = max(8, (_PER_BUF_BYTES // (tb * E * itemsize)) // 8 * 8)
        ts = min(ts, S)
    return tb, ts


def prepare_params(params):
    """One-time weight prep (hoisted out of the per-call wrapper):
    bf16 weights, f32 biases, final projection padded to 128 lanes."""
    H4, out_size = params["w3"].shape
    OP = _LANE_PAD
    w3 = jnp.zeros((H4, OP), jnp.bfloat16).at[:, :out_size].set(
        params["w3"].astype(jnp.bfloat16))
    b3 = jnp.zeros((1, OP), jnp.float32).at[:, :out_size].set(
        params["b3"].astype(jnp.float32).reshape(1, -1))
    return {
        "w1": params["w1"].astype(jnp.bfloat16),
        "b1": params["b1"].astype(jnp.float32).reshape(1, -1),
        "w2": params["w2"].astype(jnp.bfloat16),
        "b2": params["b2"].astype(jnp.float32).reshape(1, -1),
        "w3": w3,
        "b3": b3,
        "out_size": out_size,
    }


def mlp_forward(x, prep):
    """x: (B, S, E), native dtype (f32). prep: output of prepare_params."""
    B, S, E = x.shape
    H = prep["w1"].shape[1]
    H4 = prep["w2"].shape[1]
    OP = _LANE_PAD
    out_size = prep["out_size"]
    itemsize = jnp.dtype(x.dtype).itemsize

    TB, TS = _choose_tiles(B, S, E, itemsize)
    grid = (pl.cdiv(B, TB), pl.cdiv(S, TS))
    need_s_mask = (S % TS) != 0

    kernel = functools.partial(_mlp_kernel, inv_s=1.0 / S, seq_len=S, ts=TS,
                               need_s_mask=need_s_mask)

    cost = pl.CostEstimate(
        flops=2 * B * (E * H + H * H4 + H4 * OP),
        transcendentals=0,
        bytes_accessed=(B * S * E * itemsize                 # x (dominant)
                        + 2 * (E * H + H * H4 + H4 * OP)     # bf16 weights
                        + 4 * (H + H4 + OP)                  # f32 biases
                        + 4 * B * OP),                       # f32 output
    )

    out_padded = pl.pallas_call(
        kernel,
        out_shape=jax.ShapeDtypeStruct((B, OP), jnp.float32),
        grid_spec=pltpu.PrefetchScalarGridSpec(
            num_scalar_prefetch=0,
            grid=grid,
            in_specs=[
                # x: batch- (and possibly sequence-) tiled, double-buffered.
                pl.BlockSpec((TB, TS, E), lambda i, s: (i, s, 0)),
                # Weights/biases: constant block index -> resident in VMEM.
                pl.BlockSpec((E, H), lambda i, s: (0, 0)),
                pl.BlockSpec((1, H), lambda i, s: (0, 0)),
                pl.BlockSpec((H, H4), lambda i, s: (0, 0)),
                pl.BlockSpec((1, H4), lambda i, s: (0, 0)),
                pl.BlockSpec((H4, OP), lambda i, s: (0, 0)),
                pl.BlockSpec((1, OP), lambda i, s: (0, 0)),
            ],
            out_specs=pl.BlockSpec((TB, OP), lambda i, s: (i, 0)),
            scratch_shapes=[pltpu.VMEM((TB, E), jnp.float32)],  # pooled-sum acc
        ),
        compiler_params=pltpu.CompilerParams(
            dimension_semantics=("parallel", "arbitrary"),
            vmem_limit_bytes=_VMEM_LIMIT),
        cost_estimate=cost,
    )(x, prep["w1"], prep["b1"], prep["w2"], prep["b2"], prep["w3"], prep["b3"])

    return out_padded[:, :out_size]


def _xavier_uniform(key, fan_in, fan_out, dtype=jnp.float32):
    # Matches torch.nn.init.xavier_uniform_ bound; stored transposed as (in, out).
    bound = math.sqrt(6.0 / (fan_in + fan_out))
    return jax.random.uniform(key, (fan_in, fan_out), dtype=dtype,
                              minval=-bound, maxval=bound)


def init_params(key, emb_size=768, hidden_nodes=128, output_size=3):
    k1, k2, k3 = jax.random.split(key, 3)
    h4 = hidden_nodes // 4
    return {
        "w1": _xavier_uniform(k1, emb_size, hidden_nodes),
        "b1": jnp.zeros((1, hidden_nodes), jnp.float32),
        "w2": _xavier_uniform(k2, hidden_nodes, h4),
        "b2": jnp.zeros((1, h4), jnp.float32),
        "w3": _xavier_uniform(k3, h4, output_size),
        "b3": jnp.zeros((1, output_size), jnp.float32),
    }


def _reference(x, p):
    pooled = jnp.mean(x, axis=1)
    h1 = jnp.maximum(pooled @ p["w1"] + p["b1"], 0.0)
    h2 = jnp.maximum(h1 @ p["w2"] + p["b2"], 0.0)
    return h2 @ p["w3"] + p["b3"]


if __name__ == "__main__":
    # task='sum' -> output_size = 3
    B, S, E, H = 2, 8, 768, 128
    key = jax.random.PRNGKey(0)
    kx, kp = jax.random.split(key)

    x = jax.random.normal(kx, (B, S, E), dtype=jnp.float32)
    params = init_params(kp, emb_size=E, hidden_nodes=H, output_size=3)
    prep = prepare_params(params)  # one-time weight prep (bf16 cast + lane pad)

    out = jax.block_until_ready(mlp_forward(x, prep))

    ref = _reference(x, params)  # f32 reference; kernel matmuls run in bf16
    assert out.shape == (B, 3), out.shape
    assert jnp.allclose(out, ref, atol=3e-2, rtol=3e-2), "mismatch vs reference"

    # TODO(synk): probs/pred/cond_exp (softmax/sigmoid/argmax heads) are trivial
    # post-processing of this forward and are left to plain JAX.

    print("KERNEL_OK")
</pallas_src>

<mosaic_0001>
module attributes {stable_mosaic.version = 11 : i64} {
  func.func @_mlp_kernel(%arg0: i32, %arg1: i32, %arg2: memref<2x8x768xf32, #tpu.memory_space<vmem>>, %arg3: memref<768x128xbf16, #tpu.memory_space<vmem>>, %arg4: memref<1x128xf32, #tpu.memory_space<vmem>>, %arg5: memref<128x32xbf16, #tpu.memory_space<vmem>>, %arg6: memref<1x32xf32, #tpu.memory_space<vmem>>, %arg7: memref<32x128xbf16, #tpu.memory_space<vmem>>, %arg8: memref<1x128xf32, #tpu.memory_space<vmem>>, %arg9: memref<2x128xf32, #tpu.memory_space<vmem>>, %arg10: memref<2x768xf32, #tpu.memory_space<vmem>>) attributes {dimension_semantics = [#tpu.dimension_semantics<parallel>, #tpu.dimension_semantics<arbitrary>], iteration_bounds = array<i64: 1, 1>, scalar_prefetch = 0 : i64, scratch_operands = 1 : i64, tpu.core_type = #tpu.core_type<tc>, window_params = [{transform_indices = @transform_0, window_bounds = array<i64: 2, 8, 768>}, {pipeline_mode = #tpu.pipeline_mode<synchronous>, transform_indices = @transform_1, window_bounds = array<i64: 768, 128>}, {pipeline_mode = #tpu.pipeline_mode<synchronous>, transform_indices = @transform_2, window_bounds = array<i64: 1, 128>}, {pipeline_mode = #tpu.pipeline_mode<synchronous>, transform_indices = @transform_3, window_bounds = array<i64: 128, 32>}, {pipeline_mode = #tpu.pipeline_mode<synchronous>, transform_indices = @transform_4, window_bounds = array<i64: 1, 32>}, {pipeline_mode = #tpu.pipeline_mode<synchronous>, transform_indices = @transform_5, window_bounds = array<i64: 32, 128>}, {pipeline_mode = #tpu.pipeline_mode<synchronous>, transform_indices = @transform_6, window_bounds = array<i64: 1, 128>}, {transform_indices = @transform_7, window_bounds = array<i64: 2, 128>}]} {
    %c0_i32 = arith.constant 0 : i32
    %0 = arith.cmpi eq, %arg1, %c0_i32 : i32
    %1 = arith.extui %0 : i1 to i32
    %c0_i32_0 = arith.constant 0 : i32
    %2 = arith.cmpi ne, %1, %c0_i32_0 : i32
    scf.if %2 {
      %cst_9 = arith.constant 0.000000e+00 : f32
      %11 = vector.broadcast %cst_9 : f32 to vector<2x768xf32>
      %c0_10 = arith.constant 0 : index
      %c0_11 = arith.constant 0 : index
      %12 = vector.load %arg10[%c0_10, %c0_11] : memref<2x768xf32, #tpu.memory_space<vmem>>, vector<2x768xf32>
      tpu.vector_store %arg10[%c0_10, %c0_11], %11 {strides = array<i32>} : memref<2x768xf32, #tpu.memory_space<vmem>>, vector<2x768xf32>,
    } else {
    }
    %c0 = arith.constant 0 : index
    %c0_1 = arith.constant 0 : index
    %c0_2 = arith.constant 0 : index
    %3 = vector.load %arg2[%c0, %c0_1, %c0_2] : memref<2x8x768xf32, #tpu.memory_space<vmem>>, vector<2x8x768xf32>
    %c0_3 = arith.constant 0 : index
    %c0_4 = arith.constant 0 : index
    %4 = vector.load %arg10[%c0_3, %c0_4] : memref<2x768xf32, #tpu.memory_space<vmem>>, vector<2x768xf32>
    %cst = arith.constant dense<0.000000e+00> : vector<2x768xf32>
    %5 = vector.multi_reduction <add>, %3, %cst [1] : vector<2x8x768xf32> to vector<2x768xf32>
    %6 = arith.addf %4, %5 : vector<2x768xf32>
    %c0_5 = arith.constant 0 : index
    %c0_6 = arith.constant 0 : index
    %7 = vector.load %arg10[%c0_5, %c0_6] : memref<2x768xf32, #tpu.memory_space<vmem>>, vector<2x768xf32>
    tpu.vector_store %arg10[%c0_5, %c0_6], %6 {strides = array<i32>} : memref<2x768xf32, #tpu.memory_space<vmem>>, vector<2x768xf32>,
    %c0_i32_7 = arith.constant 0 : i32
    %8 = arith.cmpi eq, %arg1, %c0_i32_7 : i32
    %9 = arith.extui %8 : i1 to i32
    %c0_i32_8 = arith.constant 0 : i32
    %10 = arith.cmpi ne, %9, %c0_i32_8 : i32
    scf.if %10 {
      %c0_9 = arith.constant 0 : index
      %c0_10 = arith.constant 0 : index
      %11 = vector.load %arg10[%c0_9, %c0_10] : memref<2x768xf32, #tpu.memory_space<vmem>>, vector<2x768xf32>
      %12 = arith.truncf %11 : vector<2x768xf32> to vector<2x768xbf16>
      %c0_11 = arith.constant 0 : index
      %c0_12 = arith.constant 0 : index
      %13 = vector.load %arg3[%c0_11, %c0_12] : memref<768x128xbf16, #tpu.memory_space<vmem>>, vector<768x128xbf16>
      %cst_13 = arith.constant dense<0.000000e+00> : vector<2x128xf32>
      %14 = tpu.matmul %12, %13, %cst_13 {dimension_numbers = #tpu.dot_dimension_numbers<[1], [0], [0], [1], [0, 0, 1, 1], [], []>} : vector<2x768xbf16>, vector<768x128xbf16>, vector<2x128xf32> -> vector<2x128xf32>
      %cst_14 = arith.constant 1.250000e-01 : f32
      %15 = vector.broadcast %cst_14 : f32 to vector<2x128xf32>
      %16 = arith.mulf %14, %15 : vector<2x128xf32>
      %c0_15 = arith.constant 0 : index
      %c0_16 = arith.constant 0 : index
      %17 = vector.load %arg4[%c0_15, %c0_16] : memref<1x128xf32, #tpu.memory_space<vmem>>, vector<1x128xf32>
      %18 = vector.broadcast %17 : vector<1x128xf32> to vector<2x128xf32>
      %19 = arith.addf %16, %18 : vector<2x128xf32>
      %cst_17 = arith.constant 0.000000e+00 : f32
      %20 = vector.broadcast %cst_17 : f32 to vector<2x128xf32>
      %21 = arith.maximumf %19, %20 : vector<2x128xf32>
      %22 = arith.truncf %21 : vector<2x128xf32> to vector<2x128xbf16>
      %c0_18 = arith.constant 0 : index
      %c0_19 = arith.constant 0 : index
      %23 = vector.load %arg5[%c0_18, %c0_19] : memref<128x32xbf16, #tpu.memory_space<vmem>>, vector<128x32xbf16>
      %cst_20 = arith.constant dense<0.000000e+00> : vector<2x32xf32>
      %24 = tpu.matmul %22, %23, %cst_20 {dimension_numbers = #tpu.dot_dimension_numbers<[1], [0], [0], [1], [0, 0, 1, 1], [], []>} : vector<2x128xbf16>, vector<128x32xbf16>, vector<2x32xf32> -> vector<2x32xf32>
      %c0_21 = arith.constant 0 : index
      %c0_22 = arith.constant 0 : index
      %25 = vector.load %arg6[%c0_21, %c0_22] : memref<1x32xf32, #tpu.memory_space<vmem>>, vector<1x32xf32>
      %26 = vector.broadcast %25 : vector<1x32xf32> to vector<2x32xf32>
      %27 = arith.addf %24, %26 : vector<2x32xf32>
      %cst_23 = arith.constant 0.000000e+00 : f32
      %28 = vector.broadcast %cst_23 : f32 to vector<2x32xf32>
      %29 = arith.maximumf %27, %28 : vector<2x32xf32>
      %30 = arith.truncf %29 : vector<2x32xf32> to vector<2x32xbf16>
      %c0_24 = arith.constant 0 : index
      %c0_25 = arith.constant 0 : index
      %31 = vector.load %arg7[%c0_24, %c0_25] : memref<32x128xbf16, #tpu.memory_space<vmem>>, vector<32x128xbf16>
      %cst_26 = arith.constant dense<0.000000e+00> : vector<2x128xf32>
      %32 = tpu.matmul %30, %31, %cst_26 {dimension_numbers = #tpu.dot_dimension_numbers<[1], [0], [0], [1], [0, 0, 1, 1], [], []>} : vector<2x32xbf16>, vector<32x128xbf16>, vector<2x128xf32> -> vector<2x128xf32>
      %c0_27 = arith.constant 0 : index
      %c0_28 = arith.constant 0 : index
      %33 = vector.load %arg8[%c0_27, %c0_28] : memref<1x128xf32, #tpu.memory_space<vmem>>, vector<1x128xf32>
      %34 = vector.broadcast %33 : vector<1x128xf32> to vector<2x128xf32>
      %35 = arith.addf %32, %34 : vector<2x128xf32>
      %c0_29 = arith.constant 0 : index
      %c0_30 = arith.constant 0 : index
      %36 = vector.load %arg9[%c0_29, %c0_30] : memref<2x128xf32, #tpu.memory_space<vmem>>, vector<2x128xf32>
      tpu.vector_store %arg9[%c0_29, %c0_30], %35 {strides = array<i32>} : memref<2x128xf32, #tpu.memory_space<vmem>>, vector<2x128xf32>,
    } else {
    }
    return
  }
  func.func @transform_0(%arg0: i32, %arg1: i32) -> (i32, i32, i32) {
    %c0_i32 = arith.constant 0 : i32
    %c0_i32_0 = arith.constant 0 : i32
    return %arg0, %arg1, %c0_i32 : i32, i32, i32
  }
  func.func @transform_1(%arg0: i32, %arg1: i32) -> (i32, i32) {
    %c0_i32 = arith.constant 0 : i32
    %c0_i32_0 = arith.constant 0 : i32
    %c0_i32_1 = arith.constant 0 : i32
    return %c0_i32, %c0_i32_0 : i32, i32
  }
  func.func @transform_2(%arg0: i32, %arg1: i32) -> (i32, i32) {
    %c0_i32 = arith.constant 0 : i32
    %c0_i32_0 = arith.constant 0 : i32
    %c0_i32_1 = arith.constant 0 : i32
    return %c0_i32, %c0_i32_0 : i32, i32
  }
  func.func @transform_3(%arg0: i32, %arg1: i32) -> (i32, i32) {
    %c0_i32 = arith.constant 0 : i32
    %c0_i32_0 = arith.constant 0 : i32
    %c0_i32_1 = arith.constant 0 : i32
    return %c0_i32, %c0_i32_0 : i32, i32
  }
  func.func @transform_4(%arg0: i32, %arg1: i32) -> (i32, i32) {
    %c0_i32 = arith.constant 0 : i32
    %c0_i32_0 = arith.constant 0 : i32
    %c0_i32_1 = arith.constant 0 : i32
    return %c0_i32, %c0_i32_0 : i32, i32
  }
  func.func @transform_5(%arg0: i32, %arg1: i32) -> (i32, i32) {
    %c0_i32 = arith.constant 0 : i32
    %c0_i32_0 = arith.constant 0 : i32
    %c0_i32_1 = arith.constant 0 : i32
    return %c0_i32, %c0_i32_0 : i32, i32
  }
  func.func @transform_6(%arg0: i32, %arg1: i32) -> (i32, i32) {
    %c0_i32 = arith.constant 0 : i32
    %c0_i32_0 = arith.constant 0 : i32
    %c0_i32_1 = arith.constant 0 : i32
    return %c0_i32, %c0_i32_0 : i32, i32
  }
  func.func @transform_7(%arg0: i32, %arg1: i32) -> (i32, i32) {
    %c0_i32 = arith.constant 0 : i32
    %c0_i32_0 = arith.constant 0 : i32
    return %arg0, %c0_i32 : i32, i32
  }
}

</mosaic_0001>

<llo_original>
// kernel: tpu_custom_call.1
$region0: #{tpu_custom_call.1}
  #allocation0 [shape = 'u32[]', space=smem, size = 0x4, offset = 0x4, fixed_abs, tag = 'smem constant byte address 0x4 - core index']
  #allocation1 [shape = 'u32[72,128]{1,0:T(1,128)}', space=vmem, size = 0x9000, scoped, tag = 'internal scratch']
  #allocation2 [shape = 'f32[2,768]{1,0:T(2,128)}', space=vmem, size = 0x1800, scoped, tag = 'scratch operand']
  %s0 = inlined_call_operand.hbm [shape: f32[2,8,768], index: 0, kind: input, shape index: {}]
  %s1 = inlined_call_operand.hbm [shape: bf16[768,128], index: 1, kind: input, shape index: {}]
  %s2 = inlined_call_operand.vmem [shape: f32[1,128], index: 2, kind: input, shape index: {}]
  %s3 = inlined_call_operand.vmem [shape: bf16[128,32], index: 3, kind: input, shape index: {}]
  %s4 = inlined_call_operand.vmem [shape: f32[1,32], index: 4, kind: input, shape index: {}]
  %s5 = inlined_call_operand.vmem [shape: bf16[32,128], index: 5, kind: input, shape index: {}]
  %s6 = inlined_call_operand.vmem [shape: f32[1,128], index: 6, kind: input, shape index: {}]
  %s7 = inlined_call_operand.hbm [shape: f32[2,128], index: 7, kind: output, shape index: {}]
  %s8 = sld [smem:[#allocation0]]
  $region54: #{tpu_custom_call.1} parent=0
    _
  %s10 = ssub.s32 1, %s8
  %s11 = scalar_select 0, %s10, %s8
  $region1: #{tpu_custom_call.1} parent=0
    #allocation3 [shape = 'u8[49152]{0}', space=vmem, size = 0xc000, scoped, tag = 'input window, operand 0, single buffered']
    #allocation4 [shape = 's32[1]{0}', space=sflag, size = 0x4, scoped, tag = 'scoped memory for tpu_custom_call.1']
    #allocation5 [shape = 's32[1]{0}', space=sflag, size = 0x4, scoped, tag = 'scoped memory for tpu_custom_call.1']
    #allocation6 [shape = 'u8[196608]{0}', space=vmem, size = 0x30000, scoped, tag = 'input window, operand 1, single buffered']
    #allocation7 [shape = 's32[1]{0}', space=sflag, size = 0x4, scoped, tag = 'scoped memory for tpu_custom_call.1']
    #allocation8 [shape = 'u8[1024]{0}', space=vmem, size = 0x400, scoped, tag = 'output window, operand 0, single buffered']
    %12 = vsyncpa [#allocation4], 0
    %13 = vsyncpa [#allocation7], 0
    %14 = vsyncpa [#allocation5], 0
    // Predicated region
    $region2: #{tpu_custom_call.1} parent=1 // pred_check
      _
    $region3: #{tpu_custom_call.1} parent=1 // pred_check_branch
      %16 = sbr.rel (0) target = $region5
    $region4: #{tpu_custom_call.1} parent=1 // pred_region
      %18 = vsyncadd [#allocation4], 0
      %s19 = sshll.u32 %s0, 4
      %s20 = int_to_ptr.hbm [resolvable:$true] %s19
      %s21 = sshll.u32 [#allocation3], 4
      %s22 = int_to_ptr.vmem [resolvable:$true] %s21
      %27 = dma.hbm_to_vmem [thread:$0]  %s20, 1536, %s22, [#allocation4], 768, 768, 48
    $region5: #{tpu_custom_call.1} parent=1 // pred_fallthru
      _
    // Predicated region
    $region6: #{tpu_custom_call.1} parent=1 // pred_check
      _
    $region7: #{tpu_custom_call.1} parent=1 // pred_check_branch
      %29 = sbr.rel (0) target = $region9
    $region8: #{tpu_custom_call.1} parent=1 // pred_region
      %31 = vsyncadd [#allocation7], 0
      %s32 = sshll.u32 %s1, 4
      %s33 = int_to_ptr.hbm [resolvable:$true] %s32
      %s34 = sshll.u32 [#allocation6], 4
      %s35 = int_to_ptr.vmem [resolvable:$true] %s34
      %40 = dma.hbm_to_vmem [thread:$0]  %s33, 6144, %s35, [#allocation7], 64, 64, 4
    $region9: #{tpu_custom_call.1} parent=1 // pred_fallthru
      _
    // Predicated region
    $region10: #{tpu_custom_call.1} parent=1 // pred_check
      _
    $region11: #{tpu_custom_call.1} parent=1 // pred_check_branch
      %42 = sbr.rel (0) target = $region13
    $region12: #{tpu_custom_call.1} parent=1 // pred_region
      _
    $region13: #{tpu_custom_call.1} parent=1 // pred_fallthru
      _
    // Predicated region
    $region14: #{tpu_custom_call.1} parent=1 // pred_check
      _
    $region15: #{tpu_custom_call.1} parent=1 // pred_check_branch
      %44 = sbr.rel (0) target = $region17
    $region16: #{tpu_custom_call.1} parent=1 // pred_region
      _
    $region17: #{tpu_custom_call.1} parent=1 // pred_fallthru
      _
    // Predicated region
    $region18: #{tpu_custom_call.1} parent=1 // pred_check
      _
    $region19: #{tpu_custom_call.1} parent=1 // pred_check_branch
      %46 = sbr.rel (0) target = $region21
    $region20: #{tpu_custom_call.1} parent=1 // pred_region
      _
    $region21: #{tpu_custom_call.1} parent=1 // pred_fallthru
      _
    // Predicated region
    $region22: #{tpu_custom_call.1} parent=1 // pred_check
      _
    $region23: #{tpu_custom_call.1} parent=1 // pred_check_branch
      %48 = sbr.rel (0) target = $region25
    $region24: #{tpu_custom_call.1} parent=1 // pred_region
      _
    $region25: #{tpu_custom_call.1} parent=1 // pred_fallthru
      _
    // Predicated region
    $region26: #{tpu_custom_call.1} parent=1 // pred_check
      _
    $region27: #{tpu_custom_call.1} parent=1 // pred_check_branch
      %50 = sbr.rel (0) target = $region29
    $region28: #{tpu_custom_call.1} parent=1 // pred_region
      _
    $region29: #{tpu_custom_call.1} parent=1 // pred_fallthru
      _
    // Predicated region
    $region30: #{tpu_custom_call.1} parent=1 // pred_check
      _
    $region31: #{tpu_custom_call.1} parent=1 // pred_check_branch
      %52 = sbr.rel (0) target = $region33
    $region32: #{tpu_custom_call.1} parent=1 // pred_region
      %54 = dma.done [#allocation4], 1536
    $region33: #{tpu_custom_call.1} parent=1 // pred_fallthru
      _
    // Predicated region
    $region34: #{tpu_custom_call.1} parent=1 // pred_check
      _
    $region35: #{tpu_custom_call.1} parent=1 // pred_check_branch
      %56 = sbr.rel (0) target = $region37
    $region36: #{tpu_custom_call.1} parent=1 // pred_region
      %58 = dma.done [#allocation7], 6144
    $region37: #{tpu_custom_call.1} parent=1 // pred_fallthru
      _
    %p60 = scmp.eq.s32.totalorder 0, 0
    // Predicated region
    $region38: #{tpu_custom_call.1} parent=1 // pred_check
      %p61 = pneg %p60
    $region39: #{tpu_custom_call.1} parent=1 // pred_check_branch
      %63 = sbr.rel (%p61) target = $region41
    $region40: #{tpu_custom_call.1} parent=1 // pred_region
      %64 = vst [vmem:[#allocation2] sm:$0xff] 0.0
      %65 = vst [vmem:[#allocation2 + $0x8] sm:$0xf] 0.0
    $region41: #{tpu_custom_call.1} parent=1 // pred_fallthru
      _
    %v66 = vld [vmem:[#allocation3] sm:$0xff]
    %v67 = vld [vmem:[#allocation3 + $0x8] sm:$0xff]
    %v68 = vld [vmem:[#allocation3 + $0x10] sm:$0xff]
    %v69 = vld [vmem:[#allocation3 + $0x18] sm:$0xff]
    %v70 = vld [vmem:[#allocation3 + $0x20] sm:$0xff]
    %v71 = vld [vmem:[#allocation3 + $0x28] sm:$0xff]
    %v72 = vld [vmem:[#allocation3 + $0x30] sm:$0xff]
    %v73 = vld [vmem:[#allocation3 + $0x38] sm:$0xff]
    %v74 = vld [vmem:[#allocation3 + $0x40] sm:$0xff]
    %v75 = vld [vmem:[#allocation3 + $0x48] sm:$0xff]
    %v76 = vld [vmem:[#allocation3 + $0x50] sm:$0xff]
    %v77 = vld [vmem:[#allocation3 + $0x58] sm:$0xff]
    %v78 = vld [vmem:[#allocation2] sm:$0xff]
    %v79 = vld [vmem:[#allocation2 + $0x8] sm:$0xf]
    %v80 = vrot.slane %v66, 4
    %v81 = vadd.f32 %v66, %v80
    %v82 = vrot.slane %v81, 2
    %v83 = vadd.f32 %v81, %v82
    %v84 = vrot.slane %v83, 1
    %v85 = vadd.f32 %v83, %v84
    %v86 = vrot.slane %v67, 4
    %v87 = vadd.f32 %v67, %v86
    %v88 = vrot.slane %v87, 2
    %v89 = vadd.f32 %v87, %v88
    %v90 = vrot.slane %v89, 1
    %v91 = vadd.f32 %v89, %v90
    %v92 = vrot.slane %v68, 4
    %v93 = vadd.f32 %v68, %v92
    %v94 = vrot.slane %v93, 2
    %v95 = vadd.f32 %v93, %v94
    %v96 = vrot.slane %v95, 1
    %v97 = vadd.f32 %v95, %v96
    %v98 = vrot.slane %v69, 4
    %v99 = vadd.f32 %v69, %v98
    %v100 = vrot.slane %v99, 2
    %v101 = vadd.f32 %v99, %v100
    %v102 = vrot.slane %v101, 1
    %v103 = vadd.f32 %v101, %v102
    %v104 = vrot.slane %v70, 4
    %v105 = vadd.f32 %v70, %v104
    %v106 = vrot.slane %v105, 2
    %v107 = vadd.f32 %v105, %v106
    %v108 = vrot.slane %v107, 1
    %v109 = vadd.f32 %v107, %v108
    %v110 = vrot.slane %v71, 4
    %v111 = vadd.f32 %v71, %v110
    %v112 = vrot.slane %v111, 2
    %v113 = vadd.f32 %v111, %v112
    %v114 = vrot.slane %v113, 1
    %v115 = vadd.f32 %v113, %v114
    %v116 = vrot.slane %v72, 4
    %v117 = vadd.f32 %v72, %v116
    %v118 = vrot.slane %v117, 2
    %v119 = vadd.f32 %v117, %v118
    %v120 = vrot.slane %v119, 1
    %v121 = vadd.f32 %v119, %v120
    %v122 = vrot.slane %v73, 4
    %v123 = vadd.f32 %v73, %v122
    %v124 = vrot.slane %v123, 2
    %v125 = vadd.f32 %v123, %v124
    %v126 = vrot.slane %v125, 1
    %v127 = vadd.f32 %v125, %v126
    %v128 = vrot.slane %v74, 4
    %v129 = vadd.f32 %v74, %v128
    %v130 = vrot.slane %v129, 2
    %v131 = vadd.f32 %v129, %v130
    %v132 = vrot.slane %v131, 1
    %v133 = vadd.f32 %v131, %v132
    %v134 = vrot.slane %v75, 4
    %v135 = vadd.f32 %v75, %v134
    %v136 = vrot.slane %v135, 2
    %v137 = vadd.f32 %v135, %v136
    %v138 = vrot.slane %v137, 1
    %v139 = vadd.f32 %v137, %v138
    %v140 = vrot.slane %v76, 4
    %v141 = vadd.f32 %v76, %v140
    %v142 = vrot.slane %v141, 2
    %v143 = vadd.f32 %v141, %v142
    %v144 = vrot.slane %v143, 1
    %v145 = vadd.f32 %v143, %v144
    %v146 = vrot.slane %v77, 4
    %v147 = vadd.f32 %v77, %v146
    %v148 = vrot.slane %v147, 2
    %v149 = vadd.f32 %v147, %v148
    %v150 = vrot.slane %v149, 1
    %v151 = vadd.f32 %v149, %v150
    %v164 = vrot.slane %v91, 6
    %v165 = vrot.slane %v97, 4
    %v166 = vrot.slane %v103, 2
    %v167 = vrot.slane %v115, 6
    %v168 = vrot.slane %v127, 6
    %v169 = vrot.slane %v133, 4
    %v170 = vrot.slane %v139, 2
    %v171 = vrot.slane %v151, 6
    %vm172 = vcmask 1041408
    %v173 = vsel %vm172, %v85, %v164
    %vm174 = vcmask 1045508
    %v175 = vsel %vm174, %v165, %v166
    %vm176 = vcmask 1043456
    %v177 = vsel %vm176, %v173, %v175
    %v178 = vsel %vm172, %v109, %v167
    %v179 = vsel %vm172, %v121, %v168
    %v180 = vsel %vm174, %v169, %v170
    %v181 = vsel %vm176, %v179, %v180
    %v182 = vsel %vm172, %v145, %v171
    %vm183 = vcmask 1044484
    %v184 = vsel %vm183, %v177, %v177
    %vm185 = vcmask 1046534
    %v186 = vsel %vm185, %v177, %v184
    %v187 = vrot.slane %v181, 7
    %vm188 = vcmask 1041409
    %v189 = vsel %vm188, %v187, %v186
    %vm190 = vcmask 1043459
    %v191 = vsel %vm190, %v187, %v189
    %vm192 = vcmask 1045509
    %v193 = vsel %vm192, %v187, %v191
    %vm194 = vcmask 1047559
    %v195 = vsel %vm194, %v187, %v193
    %v196 = vsel %vm183, %v178, %v178
    %v197 = vsel %vm185, %v178, %v196
    %v198 = vrot.slane %v182, 7
    %v199 = vsel %vm188, %v198, %v197
    %v200 = vsel %vm190, %v198, %v199
    %v201 = vsel %vm192, %v198, %v200
    %v202 = vsel %vm194, %v198, %v201
    %v205 = vadd.f32 %v78, %v195
    %v206 = vadd.f32 %v79, %v202
    %207 = vst [vmem:[#allocation2] sm:$0xff] %v205
    %208 = vst [vmem:[#allocation2 + $0x8] sm:$0xf] %v206
    // Predicated region
    $region42: #{tpu_custom_call.1} parent=1 // pred_check
      %p209 = pneg %p60
    $region43: #{tpu_custom_call.1} parent=1 // pred_check_branch
      %211 = sbr.rel (%p209) target = $region45
    $region44: #{tpu_custom_call.1} parent=1 // pred_region
      %v212 = vld [vmem:[#allocation2] sm:$0xff]
      %v213 = vld [vmem:[#allocation2 + $0x8] sm:$0xf]
      %216 = vst [vmem:[#allocation1] ss:$4 sm:$0xff] %v212
      %s217 = scalar_lea.vmem [#allocation1], 32
      %218 = vst [vmem:[%s217] ss:$4 sm:$0xff] %v213
      %v219 = vld.sshfl [vmem:[#allocation1] sm:$0xff pattern:$0x73625140]
      %v220 = vld.sshfl [vmem:[#allocation1 + $0x8] sm:$0xff pattern:$0x73625140]
      %v221 = vld.sshfl [vmem:[#allocation1 + $0x10] sm:$0xff pattern:$0x73625140]
      %v222 = vld.sshfl [vmem:[#allocation1 + $0x18] sm:$0xff pattern:$0x73625140]
      %v223 = vld.sshfl [vmem:[#allocation1 + $0x20] sm:$0xff pattern:$0x73625140]
      %v224 = vld.sshfl [vmem:[#allocation1 + $0x28] sm:$0xff pattern:$0x73625140]
      %v231 = vpack.c.bf16 %v219, %v219
      %v232 = vpack.c.bf16 %v220, %v220
      %v233 = vpack.c.bf16 %v221, %v221
      %v234 = vpack.c.bf16 %v222, %v222
      %v235 = vpack.c.bf16 %v223, %v223
      %v236 = vpack.c.bf16 %v224, %v224
      %v237 = vld [vmem:[#allocation6] sm:$0xf]
      %v238 = vld [vmem:[#allocation6 + $0x4] sm:$0xf]
      %v239 = vld [vmem:[#allocation6 + $0x8] sm:$0xf]
      %v240 = vld [vmem:[#allocation6 + $0xc] sm:$0xf]
      %v241 = vld [vmem:[#allocation6 + $0x10] sm:$0xf]
      %v242 = vld [vmem:[#allocation6 + $0x14] sm:$0xf]
      %v243 = vld [vmem:[#allocation6 + $0x18] sm:$0xf]
      %v244 = vld [vmem:[#allocation6 + $0x1c] sm:$0xf]
      %v245 = vld [vmem:[#allocation6 + $0x20] sm:$0xf]
      %v246 = vld [vmem:[#allocation6 + $0x24] sm:$0xf]
      %v247 = vld [vmem:[#allocation6 + $0x28] sm:$0xf]
      %v248 = vld [vmem:[#allocation6 + $0x2c] sm:$0xf]
      %v249 = vld [vmem:[#allocation6 + $0x30] sm:$0xf]
      %v250 = vld [vmem:[#allocation6 + $0x34] sm:$0xf]
      %v251 = vld [vmem:[#allocation6 + $0x38] sm:$0xf]
      %v252 = vld [vmem:[#allocation6 + $0x3c] sm:$0xf]
      %v253 = vld [vmem:[#allocation6 + $0x40] sm:$0xf]
      %v254 = vld [vmem:[#allocation6 + $0x44] sm:$0xf]
      %v255 = vld [vmem:[#allocation6 + $0x48] sm:$0xf]
      %v256 = vld [vmem:[#allocation6 + $0x4c] sm:$0xf]
      %v257 = vld [vmem:[#allocation6 + $0x50] sm:$0xf]
      %v258 = vld [vmem:[#allocation6 + $0x54] sm:$0xf]
      %v259 = vld [vmem:[#allocation6 + $0x58] sm:$0xf]
      %v260 = vld [vmem:[#allocation6 + $0x5c] sm:$0xf]
      %v261 = vld [vmem:[#allocation6 + $0x60] sm:$0xf]
      %v262 = vld [vmem:[#allocation6 + $0x64] sm:$0xf]
      %v263 = vld [vmem:[#allocation6 + $0x68] sm:$0xf]
      %v264 = vld [vmem:[#allocation6 + $0x6c] sm:$0xf]
      %v265 = vld [vmem:[#allocation6 + $0x70] sm:$0xf]
      %v266 = vld [vmem:[#allocation6 + $0x74] sm:$0xf]
      %v267 = vld [vmem:[#allocation6 + $0x78] sm:$0xf]
      %v268 = vld [vmem:[#allocation6 + $0x7c] sm:$0xf]
      %v269 = vld [vmem:[#allocation6 + $0x80] sm:$0xf]
      %v270 = vld [vmem:[#allocation6 + $0x84] sm:$0xf]
      %v271 = vld [vmem:[#allocation6 + $0x88] sm:$0xf]
      %v272 = vld [vmem:[#allocation6 + $0x8c] sm:$0xf]
      %v273 = vld [vmem:[#allocation6 + $0x90] sm:$0xf]
      %v274 = vld [vmem:[#allocation6 + $0x94] sm:$0xf]
      %v275 = vld [vmem:[#allocation6 + $0x98] sm:$0xf]
      %v276 = vld [vmem:[#allocation6 + $0x9c] sm:$0xf]
      %v277 = vld [vmem:[#allocation6 + $0xa0] sm:$0xf]
      %v278 = vld [vmem:[#allocation6 + $0xa4] sm:$0xf]
      %v279 = vld [vmem:[#allocation6 + $0xa8] sm:$0xf]
      %v280 = vld [vmem:[#allocation6 + $0xac] sm:$0xf]
      %v281 = vld [vmem:[#allocation6 + $0xb0] sm:$0xf]
      %v282 = vld [vmem:[#allocation6 + $0xb4] sm:$0xf]
      %v283 = vld [vmem:[#allocation6 + $0xb8] sm:$0xf]
      %v284 = vld [vmem:[#allocation6 + $0xbc] sm:$0xf]
      %v285 = vld [vmem:[#allocation6 + $0xc0] sm:$0xf]
      %v286 = vld [vmem:[#allocation6 + $0xc4] sm:$0xf]
      %v287 = vld [vmem:[#allocation6 + $0xc8] sm:$0xf]
      %v288 = vld [vmem:[#allocation6 + $0xcc] sm:$0xf]
      %v289 = vld [vmem:[#allocation6 + $0xd0] sm:$0xf]
      %v290 = vld [vmem:[#allocation6 + $0xd4] sm:$0xf]
      %v291 = vld [vmem:[#allocation6 + $0xd8] sm:$0xf]
      %v292 = vld [vmem:[#allocation6 + $0xdc] sm:$0xf]
      %v293 = vld [vmem:[#allocation6 + $0xe0] sm:$0xf]
      %v294 = vld [vmem:[#allocation6 + $0xe4] sm:$0xf]
      %v295 = vld [vmem:[#allocation6 + $0xe8] sm:$0xf]
      %v296 = vld [vmem:[#allocation6 + $0xec] sm:$0xf]
      %v297 = vld [vmem:[#allocation6 + $0xf0] sm:$0xf]
      %v298 = vld [vmem:[#allocation6 + $0xf4] sm:$0xf]
      %v299 = vld [vmem:[#allocation6 + $0xf8] sm:$0xf]
      %v300 = vld [vmem:[#allocation6 + $0xfc] sm:$0xf]
      %v301 = vld [vmem:[#allocation6 + $0x100] sm:$0xf]
      %v302 = vld [vmem:[#allocation6 + $0x104] sm:$0xf]
      %v303 = vld [vmem:[#allocation6 + $0x108] sm:$0xf]
      %v304 = vld [vmem:[#allocation6 + $0x10c] sm:$0xf]
      %v305 = vld [vmem:[#allocation6 + $0x110] sm:$0xf]
      %v306 = vld [vmem:[#allocation6 + $0x114] sm:$0xf]
      %v307 = vld [vmem:[#allocation6 + $0x118] sm:$0xf]
      %v308 = vld [vmem:[#allocation6 + $0x11c] sm:$0xf]
      %v309 = vld [vmem:[#allocation6 + $0x120] sm:$0xf]
      %v310 = vld [vmem:[#allocation6 + $0x124] sm:$0xf]
      %v311 = vld [vmem:[#allocation6 + $0x128] sm:$0xf]
      %v312 = vld [vmem:[#allocation6 + $0x12c] sm:$0xf]
      %v313 = vld [vmem:[#allocation6 + $0x130] sm:$0xf]
      %v314 = vld [vmem:[#allocation6 + $0x134] sm:$0xf]
      %v315 = vld [vmem:[#allocation6 + $0x138] sm:$0xf]
      %v316 = vld [vmem:[#allocation6 + $0x13c] sm:$0xf]
      %v317 = vld [vmem:[#allocation6 + $0x140] sm:$0xf]
      %v318 = vld [vmem:[#allocation6 + $0x144] sm:$0xf]
      %v319 = vld [vmem:[#allocation6 + $0x148] sm:$0xf]
      %v320 = vld [vmem:[#allocation6 + $0x14c] sm:$0xf]
      %v321 = vld [vmem:[#allocation6 + $0x150] sm:$0xf]
      %v322 = vld [vmem:[#allocation6 + $0x154] sm:$0xf]
      %v323 = vld [vmem:[#allocation6 + $0x158] sm:$0xf]
      %v324 = vld [vmem:[#allocation6 + $0x15c] sm:$0xf]
      %v325 = vld [vmem:[#allocation6 + $0x160] sm:$0xf]
      %v326 = vld [vmem:[#allocation6 + $0x164] sm:$0xf]
      %v327 = vld [vmem:[#allocation6 + $0x168] sm:$0xf]
      %v328 = vld [vmem:[#allocation6 + $0x16c] sm:$0xf]
      %v329 = vld [vmem:[#allocation6 + $0x170] sm:$0xf]
      %v330 = vld [vmem:[#allocation6 + $0x174] sm:$0xf]
      %v331 = vld [vmem:[#allocation6 + $0x178] sm:$0xf]
      %v332 = vld [vmem:[#allocation6 + $0x17c] sm:$0xf]
      %v429 = vunpack.c.l.b16 %v237
      %v430 = vunpack.c.l.b16 %v238
      %v431 = vunpack.c.l.b16 %v239
      %v432 = vunpack.c.l.b16 %v240
      %v433 = vunpack.c.l.b16 %v241
      %v434 = vunpack.c.l.b16 %v242
      %v435 = vunpack.c.l.b16 %v243
      %v436 = vunpack.c.l.b16 %v244
      %v437 = vunpack.c.l.b16 %v245
      %v438 = vunpack.c.l.b16 %v246
      %v439 = vunpack.c.l.b16 %v247
      %v440 = vunpack.c.l.b16 %v248
      %v441 = vunpack.c.l.b16 %v249
      %v442 = vunpack.c.l.b16 %v250
      %v443 = vunpack.c.l.b16 %v251
      %v444 = vunpack.c.l.b16 %v252
      %v445 = vunpack.c.l.b16 %v253
      %v446 = vunpack.c.l.b16 %v254
      %v447 = vunpack.c.l.b16 %v255
      %v448 = vunpack.c.l.b16 %v256
      %v449 = vunpack.c.l.b16 %v257
      %v450 = vunpack.c.l.b16 %v258
      %v451 = vunpack.c.l.b16 %v259
      %v452 = vunpack.c.l.b16 %v260
      %v453 = vunpack.c.l.b16 %v261
      %v454 = vunpack.c.l.b16 %v262
      %v455 = vunpack.c.l.b16 %v263
      %v456 = vunpack.c.l.b16 %v264
      %v457 = vunpack.c.l.b16 %v265
      %v458 = vunpack.c.l.b16 %v266
      %v459 = vunpack.c.l.b16 %v267
      %v460 = vunpack.c.l.b16 %v268
      %v461 = vunpack.c.l.b16 %v269
      %v462 = vunpack.c.l.b16 %v270
      %v463 = vunpack.c.l.b16 %v271
      %v464 = vunpack.c.l.b16 %v272
      %v465 = vunpack.c.l.b16 %v273
      %v466 = vunpack.c.l.b16 %v274
      %v467 = vunpack.c.l.b16 %v275
      %v468 = vunpack.c.l.b16 %v276
      %v469 = vunpack.c.l.b16 %v277
      %v470 = vunpack.c.l.b16 %v278
      %v471 = vunpack.c.l.b16 %v279
      %v472 = vunpack.c.l.b16 %v280
      %v473 = vunpack.c.l.b16 %v281
      %v474 = vunpack.c.l.b16 %v282
      %v475 = vunpack.c.l.b16 %v283
      %v476 = vunpack.c.l.b16 %v284
      %v477 = vunpack.c.l.b16 %v285
      %v478 = vunpack.c.l.b16 %v286
      %v479 = vunpack.c.l.b16 %v287
      %v480 = vunpack.c.l.b16 %v288
      %v481 = vunpack.c.l.b16 %v289
      %v482 = vunpack.c.l.b16 %v290
      %v483 = vunpack.c.l.b16 %v291
      %v484 = vunpack.c.l.b16 %v292
      %v485 = vunpack.c.l.b16 %v293
      %v486 = vunpack.c.l.b16 %v294
      %v487 = vunpack.c.l.b16 %v295
      %v488 = vunpack.c.l.b16 %v296
      %v489 = vunpack.c.l.b16 %v297
      %v490 = vunpack.c.l.b16 %v298
      %v491 = vunpack.c.l.b16 %v299
      %v492 = vunpack.c.l.b16 %v300
      %v493 = vunpack.c.l.b16 %v301
      %v494 = vunpack.c.l.b16 %v302
      %v495 = vunpack.c.l.b16 %v303
      %v496 = vunpack.c.l.b16 %v304
      %v497 = vunpack.c.l.b16 %v305
      %v498 = vunpack.c.l.b16 %v306
      %v499 = vunpack.c.l.b16 %v307
      %v500 = vunpack.c.l.b16 %v308
      %v501 = vunpack.c.l.b16 %v309
      %v502 = vunpack.c.l.b16 %v310
      %v503 = vunpack.c.l.b16 %v311
      %v504 = vunpack.c.l.b16 %v312
      %v505 = vunpack.c.l.b16 %v313
      %v506 = vunpack.c.l.b16 %v314
      %v507 = vunpack.c.l.b16 %v315
      %v508 = vunpack.c.l.b16 %v316
      %v509 = vunpack.c.l.b16 %v317
      %v510 = vunpack.c.l.b16 %v318
      %v511 = vunpack.c.l.b16 %v319
      %v512 = vunpack.c.l.b16 %v320
      %v513 = vunpack.c.l.b16 %v321
      %v514 = vunpack.c.l.b16 %v322
      %v515 = vunpack.c.l.b16 %v323
      %v516 = vunpack.c.l.b16 %v324
      %v517 = vunpack.c.l.b16 %v325
      %v518 = vunpack.c.l.b16 %v326
      %v519 = vunpack.c.l.b16 %v327
      %v520 = vunpack.c.l.b16 %v328
      %v521 = vunpack.c.l.b16 %v329
      %v522 = vunpack.c.l.b16 %v330
      %v523 = vunpack.c.l.b16 %v331
      %v524 = vunpack.c.l.b16 %v332
      %v525 = vpack.c.b16 %v430, %v429
      %v526 = vpack.c.b16 %v432, %v431
      %v527 = vpack.c.b16 %v434, %v433
      %v528 = vpack.c.b16 %v436, %v435
      %v529 = vpack.c.b16 %v438, %v437
      %v530 = vpack.c.b16 %v440, %v439
      %v531 = vpack.c.b16 %v442, %v441
      %v532 = vpack.c.b16 %v444, %v443
      %v533 = vpack.c.b16 %v446, %v445
      %v534 = vpack.c.b16 %v448, %v447
      %v535 = vpack.c.b16 %v450, %v449
      %v536 = vpack.c.b16 %v452, %v451
      %v537 = vpack.c.b16 %v454, %v453
      %v538 = vpack.c.b16 %v456, %v455
      %v539 = vpack.c.b16 %v458, %v457
      %v540 = vpack.c.b16 %v460, %v459
      %v541 = vpack.c.b16 %v462, %v461
      %v542 = vpack.c.b16 %v464, %v463
      %v543 = vpack.c.b16 %v466, %v465
      %v544 = vpack.c.b16 %v468, %v467
      %v545 = vpack.c.b16 %v470, %v469
      %v546 = vpack.c.b16 %v472, %v471
      %v547 = vpack.c.b16 %v474, %v473
      %v548 = vpack.c.b16 %v476, %v475
      %v549 = vpack.c.b16 %v478, %v477
      %v550 = vpack.c.b16 %v480, %v479
      %v551 = vpack.c.b16 %v482, %v481
      %v552 = vpack.c.b16 %v484, %v483
      %v553 = vpack.c.b16 %v486, %v485
      %v554 = vpack.c.b16 %v488, %v487
      %v555 = vpack.c.b16 %v490, %v489
      %v556 = vpack.c.b16 %v492, %v491
      %v557 = vpack.c.b16 %v494, %v493
      %v558 = vpack.c.b16 %v496, %v495
      %v559 = vpack.c.b16 %v498, %v497
      %v560 = vpack.c.b16 %v500, %v499
      %v561 = vpack.c.b16 %v502, %v501
      %v562 = vpack.c.b16 %v504, %v503
      %v563 = vpack.c.b16 %v506, %v505
      %v564 = vpack.c.b16 %v508, %v507
      %v565 = vpack.c.b16 %v510, %v509
      %v566 = vpack.c.b16 %v512, %v511
      %v567 = vpack.c.b16 %v514, %v513
      %v568 = vpack.c.b16 %v516, %v515
      %v569 = vpack.c.b16 %v518, %v517
      %v570 = vpack.c.b16 %v520, %v519
      %v571 = vpack.c.b16 %v522, %v521
      %v572 = vpack.c.b16 %v524, %v523
      %621 = vmatpush.bf16.msra.mxu0 %v532
      %622 = vmatpush.bf16.msra.mxu0 %v531
      %623 = vmatpush.bf16.msra.mxu0 %v530
      %624 = vmatpush.bf16.msra.mxu0 %v529
      %625 = vmatpush.bf16.msra.mxu0 %v528
      %626 = vmatpush.bf16.msra.mxu0 %v527
      %627 = vmatpush.bf16.msra.mxu0 %v526
      %628 = vmatpush.bf16.msra.mxu0 %v525
      %629 = vmatmul.bf16.gmra.mxu0 %v231
      %v630 = vpop.f32.mrf.mxu0
      %v631 = vadd.f32 0.0, %v630
      %v632 = vpop.f32.mrf.mxu0
      %633 = vdwg.mxu0
      %634 = vmatpush.bf16.msra.mxu0 %v540
      %635 = vmatpush.bf16.msra.mxu0 %v539
      %636 = vmatpush.bf16.msra.mxu0 %v538
      %637 = vmatpush.bf16.msra.mxu0 %v537
      %638 = vmatpush.bf16.msra.mxu0 %v536
      %639 = vmatpush.bf16.msra.mxu0 %v535
      %640 = vmatpush.bf16.msra.mxu0 %v534
      %641 = vmatpush.bf16.msra.mxu0 %v533
      %642 = vmatmul.bf16.gmra.mxu0 %v232
      %v643 = vpop.f32.mrf.mxu0
      %v644 = vadd.f32 %v631, %v643
      %v645 = vpop.f32.mrf.mxu0
      %646 = vdwg.mxu0
      %647 = vmatpush.bf16.msra.mxu0 %v548
      %648 = vmatpush.bf16.msra.mxu0 %v547
      %649 = vmatpush.bf16.msra.mxu0 %v546
      %650 = vmatpush.bf16.msra.mxu0 %v545
      %651 = vmatpush.bf16.msra.mxu0 %v544
      %652 = vmatpush.bf16.msra.mxu0 %v543
      %653 = vmatpush.bf16.msra.mxu0 %v542
      %654 = vmatpush.bf16.msra.mxu0 %v541
      %655 = vmatmul.bf16.gmra.mxu0 %v233
      %v656 = vpop.f32.mrf.mxu0
      %v657 = vadd.f32 %v644, %v656
      %v658 = vpop.f32.mrf.mxu0
      %659 = vdwg.mxu0
      %660 = vmatpush.bf16.msra.mxu0 %v556
      %661 = vmatpush.bf16.msra.mxu0 %v555
      %662 = vmatpush.bf16.msra.mxu0 %v554
      %663 = vmatpush.bf16.msra.mxu0 %v553
      %664 = vmatpush.bf16.msra.mxu0 %v552
      %665 = vmatpush.bf16.msra.mxu0 %v551
      %666 = vmatpush.bf16.msra.mxu0 %v550
      %667 = vmatpush.bf16.msra.mxu0 %v549
      %668 = vmatmul.bf16.gmra.mxu0 %v234
      %v669 = vpop.f32.mrf.mxu0
      %v670 = vadd.f32 %v657, %v669
      %v671 = vpop.f32.mrf.mxu0
      %672 = vdwg.mxu0
      %673 = vmatpush.bf16.msra.mxu0 %v564
      %674 = vmatpush.bf16.msra.mxu0 %v563
      %675 = vmatpush.bf16.msra.mxu0 %v562
      %676 = vmatpush.bf16.msra.mxu0 %v561
      %677 = vmatpush.bf16.msra.mxu0 %v560
      %678 = vmatpush.bf16.msra.mxu0 %v559
      %679 = vmatpush.bf16.msra.mxu0 %v558
      %680 = vmatpush.bf16.msra.mxu0 %v557
      %681 = vmatmul.bf16.gmra.mxu0 %v235
      %v682 = vpop.f32.mrf.mxu0
      %v683 = vadd.f32 %v670, %v682
      %v684 = vpop.f32.mrf.mxu0
      %685 = vdwg.mxu0
      %686 = vmatpush.bf16.msra.mxu0 %v572
      %687 = vmatpush.bf16.msra.mxu0 %v571
      %688 = vmatpush.bf16.msra.mxu0 %v570
      %689 = vmatpush.bf16.msra.mxu0 %v569
      %690 = vmatpush.bf16.msra.mxu0 %v568
      %691 = vmatpush.bf16.msra.mxu0 %v567
      %692 = vmatpush.bf16.msra.mxu0 %v566
      %693 = vmatpush.bf16.msra.mxu0 %v565
      %694 = vmatmul.bf16.gmra.mxu0 %v236
      %v695 = vpop.f32.mrf.mxu0
      %v696 = vadd.f32 %v683, %v695
      %v697 = vpop.f32.mrf.mxu0
      %698 = vdwg.mxu0
      %v699 = vmul.f32 %v696, 0.125
      %v700 = vld [vmem:[%s2] sm:$0x1]
      %v702 = vperm.slane %v700, 0
      %v704 = vadd.f32 %v699, %v702
      %v705 = vmax.f32 %v704, 0.0
      %v706 = vpack.c.bf16 %v705, %v705
      %v707 = vld [vmem:[%s3] sm:$0xf]
      %v708 = vld [vmem:[%s3 + $0x4] sm:$0xf]
      %v709 = vld [vmem:[%s3 + $0x8] sm:$0xf]
      %v710 = vld [vmem:[%s3 + $0xc] sm:$0xf]
      %v711 = vld [vmem:[%s3 + $0x10] sm:$0xf]
      %v712 = vld [vmem:[%s3 + $0x14] sm:$0xf]
      %v713 = vld [vmem:[%s3 + $0x18] sm:$0xf]
      %v714 = vld [vmem:[%s3 + $0x1c] sm:$0xf]
      %v715 = vld [vmem:[%s3 + $0x20] sm:$0xf]
      %v716 = vld [vmem:[%s3 + $0x24] sm:$0xf]
      %v717 = vld [vmem:[%s3 + $0x28] sm:$0xf]
      %v718 = vld [vmem:[%s3 + $0x2c] sm:$0xf]
      %v719 = vld [vmem:[%s3 + $0x30] sm:$0xf]
      %v720 = vld [vmem:[%s3 + $0x34] sm:$0xf]
      %v721 = vld [vmem:[%s3 + $0x38] sm:$0xf]
      %v722 = vld [vmem:[%s3 + $0x3c] sm:$0xf]
      %v723 = vld [vmem:[%s4] sm:$0x1]
      %v725 = vperm.slane %v723, 0
      %v743 = vunpack.c.l.b16 %v707
      %v744 = vunpack.c.l.b16 %v708
      %v745 = vunpack.c.l.b16 %v709
      %v746 = vunpack.c.l.b16 %v710
      %v747 = vunpack.c.l.b16 %v711
      %v748 = vunpack.c.l.b16 %v712
      %v749 = vunpack.c.l.b16 %v713
      %v750 = vunpack.c.l.b16 %v714
      %v751 = vunpack.c.l.b16 %v715
      %v752 = vunpack.c.l.b16 %v716
      %v753 = vunpack.c.l.b16 %v717
      %v754 = vunpack.c.l.b16 %v718
      %v755 = vunpack.c.l.b16 %v719
      %v756 = vunpack.c.l.b16 %v720
      %v757 = vunpack.c.l.b16 %v721
      %v758 = vunpack.c.l.b16 %v722
      %v759 = vpack.c.b16 %v744, %v743
      %v760 = vpack.c.b16 %v746, %v745
      %v761 = vpack.c.b16 %v748, %v747
      %v762 = vpack.c.b16 %v750, %v749
      %v763 = vpack.c.b16 %v752, %v751
      %v764 = vpack.c.b16 %v754, %v753
      %v765 = vpack.c.b16 %v756, %v755
      %v766 = vpack.c.b16 %v758, %v757
      %775 = vmatpush.bf16.msra.mxu0 %v766
      %776 = vmatpush.bf16.msra.mxu0 %v765
      %777 = vmatpush.bf16.msra.mxu0 %v764
      %778 = vmatpush.bf16.msra.mxu0 %v763
      %779 = vmatpush.bf16.msra.mxu0 %v762
      %780 = vmatpush.bf16.msra.mxu0 %v761
      %781 = vmatpush.bf16.msra.mxu0 %v760
      %782 = vmatpush.bf16.msra.mxu0 %v759
      %783 = vmatmul.bf16.gmra.mxu0 %v706
      %v784 = vpop.f32.mrf.mxu0
      %v785 = vadd.f32 %v725, %v784
      %v786 = vpop.f32.mrf.mxu0
      %787 = vdwg.mxu0
      %v788 = vmax.f32 %v785, 0.0
      %v789 = vpack.c.bf16 %v788, %v788
      %v790 = vld [vmem:[%s5] sm:$0xf]
      %v791 = vld [vmem:[%s5 + $0x4] sm:$0xf]
      %v792 = vld [vmem:[%s5 + $0x8] sm:$0xf]
      %v793 = vld [vmem:[%s5 + $0xc] sm:$0xf]
      %v794 = vld [vmem:[%s6] sm:$0x1]
      %v796 = vperm.slane %v794, 0
      %v802 = vunpack.c.l.b16 %v790
      %v803 = vunpack.c.l.b16 %v791
      %v804 = vunpack.c.l.b16 %v792
      %v805 = vunpack.c.l.b16 %v793
      %v806 = vpack.c.b16 %v803, %v802
      %v807 = vpack.c.b16 %v805, %v804
      %vm810 = vcmask 261120
      %v812 = vsel %vm810, %v789, 0
      %814 = vmatpush.bf16.msra.mxu0 0
      %815 = vmatpush.bf16.msra.mxu0 0
      %816 = vmatpush.bf16.msra.mxu0 0
      %817 = vmatpush.bf16.msra.mxu0 0
      %818 = vmatpush.bf16.msra.mxu0 0
      %819 = vmatpush.bf16.msra.mxu0 0
      %820 = vmatpush.bf16.msra.mxu0 %v807
      %821 = vmatpush.bf16.msra.mxu0 %v806
      %822 = vmatmul.bf16.gmra.mxu0 %v812
      %v823 = vpop.f32.mrf.mxu0
      %v824 = vadd.f32 %v796, %v823
      %v825 = vpop.f32.mrf.mxu0
      %826 = vdwg.mxu0
      %827 = vst [vmem:[#allocation8] sm:$0x3] %v824
    $region45: #{tpu_custom_call.1} parent=1 // pred_fallthru
      _
    // Predicated region
    $region46: #{tpu_custom_call.1} parent=1 // pred_check
      _
    $region47: #{tpu_custom_call.1} parent=1 // pred_check_branch
      %829 = sbr.rel (0) target = $region49
    $region48: #{tpu_custom_call.1} parent=1 // pred_region
      %831 = vsyncadd [#allocation5], 0
      %s833 = sshll.u32 [#allocation8], 4
      %s834 = int_to_ptr.vmem [resolvable:$true] %s833
      %s835 = sshll.u32 %s7, 4
      %s836 = int_to_ptr.hbm [resolvable:$true] %s835
      %838 = dma.vmem_to_hbm [thread:$0]  %s834, 32, %s836, [#allocation5]
    $region49: #{tpu_custom_call.1} parent=1 // pred_fallthru
      _
    // Predicated region
    $region50: #{tpu_custom_call.1} parent=1 // pred_check
      _
    $region51: #{tpu_custom_call.1} parent=1 // pred_check_branch
      %840 = sbr.rel (0) target = $region53
    $region52: #{tpu_custom_call.1} parent=1 // pred_region
      %842 = dma.done [#allocation5], 32
    $region53: #{tpu_custom_call.1} parent=1 // pred_fallthru
      _
    %843 = vsyncpa [#allocation4], 1
    %844 = vsyncpa [#allocation7], 1
    %845 = vsyncpa [#allocation5], 1

</llo_original>
